<compile_context>
chip_gen: v7x
topology: tpu7x:2x2x1
jax: 0.10.0
libtpu: 0.0.40
codegen_flags: <defaults>
</compile_context>

<pallas_src>
import math
import functools

import jax
import jax.numpy as jnp
from jax.experimental import pallas as pl
from jax.experimental.pallas import tpu as pltpu

_LANE = 128  # lane-axis alignment (last dim)
_SUB = 8     # sublane-axis alignment (second-last dim)


def _cdiv(a: int, b: int) -> int:
    return -(-a // b)


def _round_up(a: int, b: int) -> int:
    return _cdiv(a, b) * b


def _pick_divisor_tile(padded_dim: int, want: int, align: int) -> int:
    """Largest multiple of `align` that divides `padded_dim` and is <= `want`.

    `padded_dim` must itself be a multiple of `align`.  Using an exact divisor
    of the stored (init-padded) dim means the weight never needs re-padding on
    the hot path and padding waste stays < one alignment unit.
    """
    want = max(align, min(want, padded_dim))
    t = (want // align) * align
    while t > align:
        if padded_dim % t == 0:
            return t
        t -= align
    return align


def _linear_kernel(x_ref, w_ref, b_ref, o_ref, *, compute_dtype):
    """One (tm, tn) output tile, accumulated directly into o_ref over K."""
    k = pl.program_id(2)

    # bf16 operands -> native MXU rate; f32 accumulation via preferred_element_type.
    part = jnp.dot(
        x_ref[...].astype(compute_dtype),
        w_ref[...].astype(compute_dtype),
        preferred_element_type=jnp.float32,
    )

    @pl.when(k == 0)
    def _():
        # First K step: initialize the resident f32 output block and fold the
        # bias in exactly once per (i, j) tile.
        o_ref[...] = part + b_ref[...]

    @pl.when(k > 0)
    def _():
        o_ref[...] = o_ref[...] + part


@functools.partial(jax.jit, static_argnames=("tm", "tn", "tk", "precision"))
def xavier_linear_forward(x, weight_t, bias, *, tm=512, tn=512, tk=1024,
                          precision="bf16"):
    """y = x @ weight_t[:K, :N] + bias.

    x:        (M, K)   float32
    weight_t: (Kp, Np) float32  -- pre-transposed, 128-aligned-padded at init
                                   (unaligned weights are padded here as a
                                   slower fallback)
    bias:     (N,)     float32  -- true out_features (unpadded)
    precision: "bf16" (bf16 operands, f32 accumulate; fastest) or
               "float32" (strict f32 matmul, matches the PyTorch module).
    """
    M, K = x.shape
    Kw, Nw = weight_t.shape
    N = bias.shape[0]
    assert Kw >= K and Nw >= N, "weight/bias shapes inconsistent with x"

    compute_dtype = {"bf16": jnp.bfloat16, "float32": jnp.float32}[precision]

    # --- weight / bias alignment (normally free: init stores weight padded) ---
    Kp = _round_up(Kw, _LANE)
    Np = _round_up(Nw, _LANE)
    if (Kp, Np) != (Kw, Nw):
        # Fallback: full weight copy per call.  Prefer init_xavier_linear(),
        # which stores the weight already padded so this branch never runs.
        weight_t = jnp.pad(weight_t, ((0, Kp - Kw), (0, Np - Nw)))
    b2d = bias.reshape(1, N)
    if Np != N:
        b2d = jnp.pad(b2d, ((0, 0), (0, Np - N)))  # tiny (N*4 bytes)

    # --- tile selection ------------------------------------------------------
    # K / N: largest 128-multiple <= requested tile that divides the stored
    # padded dim (no weight re-pad, <= one lane-unit of padding waste).
    tk_e = _pick_divisor_tile(Kp, tk, _LANE)
    tn_e = _pick_divisor_tile(Np, tn, _LANE)
    # M: x is (re)padded per call anyway, so use ceil-split rounding to keep
    # the M tile close to the request with < 8 rows of waste.
    n_m = _cdiv(M, max(_SUB, min(tm, _round_up(M, _SUB))))
    tm_e = _round_up(_cdiv(M, n_m), _SUB)
    Mp = tm_e * n_m

    # Zero-pad x to (Mp, Kp): zeros on K keep the contraction exact (the
    # weight's padded K rows are zero too); padded M rows / N cols are sliced
    # off below.
    if (Mp, Kp) != (M, K):
        x = jnp.pad(x, ((0, Mp - M), (0, Kp - K)))

    grid = (Mp // tm_e, Np // tn_e, Kp // tk_e)
    # NOTE (v7x megacore): when hand-tuning tiles, keep grid[0]*grid[1] >= 2 or
    # the second TensorCore idles.

    cost = pl.CostEstimate(
        flops=2 * Mp * Np * Kp,
        transcendentals=0,
        bytes_accessed=(Mp * Kp + Kp * Np + Np + Mp * Np) * 4,
    )

    kernel = functools.partial(_linear_kernel, compute_dtype=compute_dtype)

    out = pl.pallas_call(
        kernel,
        out_shape=jax.ShapeDtypeStruct((Mp, Np), jnp.float32),
        grid_spec=pltpu.PrefetchScalarGridSpec(
            num_scalar_prefetch=0,
            grid=grid,
            in_specs=[
                pl.BlockSpec((tm_e, tk_e), lambda i, j, k: (i, k)),  # x tile
                pl.BlockSpec((tk_e, tn_e), lambda i, j, k: (k, j)),  # W tile
                pl.BlockSpec((1, tn_e), lambda i, j, k: (0, j)),     # bias tile
            ],
            out_specs=pl.BlockSpec((tm_e, tn_e), lambda i, j, k: (i, j)),
        ),
        compiler_params=pltpu.CompilerParams(
            dimension_semantics=("parallel", "parallel", "arbitrary"),
            # Above v5e's 16 MiB scoped default, below v7x's 64 MiB physical.
            vmem_limit_bytes=48 * 1024 * 1024,
        ),
        cost_estimate=cost,
    )(x, weight_t, b2d)

    if (Mp, Np) != (M, N):
        out = out[:M, :N]
    return out


def init_xavier_linear(key, in_features, out_features):
    """Statistically matches the module's __init__:
      weight ~ Xavier normal, std = sqrt(2 / (fan_in + fan_out))
      bias   ~ U(-1/sqrt(fan_in), 1/sqrt(fan_in))   (nn.Linear default)

    The weight is stored pre-transposed as (in_features, out_features) AND
    zero-padded to 128-aligned (Kp, Np) so the forward pass never pays a
    per-call transpose or pad.  The bias keeps its true length (it carries
    out_features for the output slice)."""
    k_w, k_b = jax.random.split(key)
    std = math.sqrt(2.0 / (in_features + out_features))
    weight_t = std * jax.random.normal(
        k_w, (in_features, out_features), jnp.float32
    )
    bound = 1.0 / math.sqrt(in_features)
    bias = jax.random.uniform(
        k_b, (out_features,), jnp.float32, minval=-bound, maxval=bound
    )
    Kp = _round_up(in_features, _LANE)
    Np = _round_up(out_features, _LANE)
    if (Kp, Np) != (in_features, out_features):
        weight_t = jnp.pad(
            weight_t, ((0, Kp - in_features), (0, Np - out_features))
        )
    return weight_t, bias


if __name__ == "__main__":
    key = jax.random.PRNGKey(0)
    k_x1, k_p1, k_x2, k_p2 = jax.random.split(key, 4)

    # --- Case 1: multi-tile grid with unaligned M/K/N.
    # Exercises init-time weight padding, per-call x/bias padding, K-axis
    # accumulation directly into the resident output block, parallel M/N
    # tiles, and the output slice.  (Small tiles chosen only to force a
    # (2, 2, 3) grid at test size.)
    M1, K1, N1 = 100, 320, 200          # padded to (112, 384, 256)
    x1 = jax.random.normal(k_x1, (M1, K1), jnp.float32)
    w1, b1 = init_xavier_linear(k_p1, K1, N1)
    w1_true = w1[:K1, :N1]
    y1_ref = jnp.dot(x1, w1_true, precision=jax.lax.Precision.HIGHEST) + b1

    # Strict-f32 path (parity with the PyTorch float32 module).
    y1 = xavier_linear_forward(x1, w1, b1, tm=64, tn=128, tk=128,
                               precision="float32")
    jax.block_until_ready(y1)
    assert y1.shape == (M1, N1)
    assert jnp.allclose(y1, y1_ref, atol=5e-3, rtol=5e-3)

    # Default fast path: bf16 operands, f32 accumulation (looser tolerance).
    y1b = xavier_linear_forward(x1, w1, b1, tm=64, tn=128, tk=128)
    jax.block_until_ready(y1b)
    assert y1b.shape == (M1, N1)
    assert jnp.allclose(y1b, y1_ref, atol=2e-2, rtol=1e-2)

    # --- Case 2: tiny shape (original module demo scale), default tiles
    # (clamped to the padded problem size), default bf16 path.
    M2, K2, N2 = 8, 32, 64
    x2 = jax.random.normal(k_x2, (M2, K2), jnp.float32)
    w2, b2 = init_xavier_linear(k_p2, K2, N2)
    y2 = xavier_linear_forward(x2, w2, b2)
    jax.block_until_ready(y2)
    y2_ref = (
        jnp.dot(x2, w2[:K2, :N2], precision=jax.lax.Precision.HIGHEST) + b2
    )
    assert y2.shape == (M2, N2)
    assert jnp.allclose(y2, y2_ref, atol=1e-2, rtol=1e-2)

    print("KERNEL_OK")
</pallas_src>

<mosaic_0001>
module attributes {stable_mosaic.version = 11 : i64} {
  func.func @_linear_kernel(%arg0: i32, %arg1: i32, %arg2: i32, %arg3: memref<56x128xf32, #tpu.memory_space<vmem>>, %arg4: memref<128x128xf32, #tpu.memory_space<vmem>>, %arg5: memref<1x128xf32, #tpu.memory_space<vmem>>, %arg6: memref<56x128xf32, #tpu.memory_space<vmem>>) attributes {dimension_semantics = [#tpu.dimension_semantics<parallel>, #tpu.dimension_semantics<parallel>, #tpu.dimension_semantics<arbitrary>], iteration_bounds = array<i64: 2, 2, 3>, scalar_prefetch = 0 : i64, scratch_operands = 0 : i64, tpu.core_type = #tpu.core_type<tc>, window_params = [{transform_indices = @transform_0, window_bounds = array<i64: 56, 128>}, {transform_indices = @transform_1, window_bounds = array<i64: 128, 128>}, {transform_indices = @transform_2, window_bounds = array<i64: 1, 128>}, {transform_indices = @transform_3, window_bounds = array<i64: 56, 128>}]} {
    %c0 = arith.constant 0 : index
    %c0_0 = arith.constant 0 : index
    %0 = vector.load %arg3[%c0, %c0_0] : memref<56x128xf32, #tpu.memory_space<vmem>>, vector<56x128xf32>
    %c0_1 = arith.constant 0 : index
    %c0_2 = arith.constant 0 : index
    %1 = vector.load %arg4[%c0_1, %c0_2] : memref<128x128xf32, #tpu.memory_space<vmem>>, vector<128x128xf32>
    %cst = arith.constant dense<0.000000e+00> : vector<56x128xf32>
    %2 = tpu.matmul %0, %1, %cst {dimension_numbers = #tpu.dot_dimension_numbers<[1], [0], [0], [1], [0, 0, 1, 1], [], []>} : vector<56x128xf32>, vector<128x128xf32>, vector<56x128xf32> -> vector<56x128xf32>
    %c0_i32 = arith.constant 0 : i32
    %3 = arith.cmpi eq, %arg2, %c0_i32 : i32
    %4 = arith.extui %3 : i1 to i32
    %c0_i32_3 = arith.constant 0 : i32
    %5 = arith.cmpi ne, %4, %c0_i32_3 : i32
    scf.if %5 {
      %c0_6 = arith.constant 0 : index
      %c0_7 = arith.constant 0 : index
      %9 = vector.load %arg5[%c0_6, %c0_7] : memref<1x128xf32, #tpu.memory_space<vmem>>, vector<1x128xf32>
      %10 = vector.broadcast %9 : vector<1x128xf32> to vector<56x128xf32>
      %11 = arith.addf %2, %10 : vector<56x128xf32>
      %c0_8 = arith.constant 0 : index
      %c0_9 = arith.constant 0 : index
      %12 = vector.load %arg6[%c0_8, %c0_9] : memref<56x128xf32, #tpu.memory_space<vmem>>, vector<56x128xf32>
      tpu.vector_store %arg6[%c0_8, %c0_9], %11 {strides = array<i32>} : memref<56x128xf32, #tpu.memory_space<vmem>>, vector<56x128xf32>,
    } else {
    }
    %c0_i32_4 = arith.constant 0 : i32
    %6 = arith.cmpi sgt, %arg2, %c0_i32_4 : i32
    %7 = arith.extui %6 : i1 to i32
    %c0_i32_5 = arith.constant 0 : i32
    %8 = arith.cmpi ne, %7, %c0_i32_5 : i32
    scf.if %8 {
      %c0_6 = arith.constant 0 : index
      %c0_7 = arith.constant 0 : index
      %9 = vector.load %arg6[%c0_6, %c0_7] : memref<56x128xf32, #tpu.memory_space<vmem>>, vector<56x128xf32>
      %10 = arith.addf %9, %2 : vector<56x128xf32>
      %c0_8 = arith.constant 0 : index
      %c0_9 = arith.constant 0 : index
      %11 = vector.load %arg6[%c0_8, %c0_9] : memref<56x128xf32, #tpu.memory_space<vmem>>, vector<56x128xf32>
      tpu.vector_store %arg6[%c0_8, %c0_9], %10 {strides = array<i32>} : memref<56x128xf32, #tpu.memory_space<vmem>>, vector<56x128xf32>,
    } else {
    }
    return
  }
  func.func @transform_0(%arg0: i32, %arg1: i32, %arg2: i32) -> (i32, i32) {
    %c0_i32 = arith.constant 0 : i32
    return %arg0, %arg2 : i32, i32
  }
  func.func @transform_1(%arg0: i32, %arg1: i32, %arg2: i32) -> (i32, i32) {
    %c0_i32 = arith.constant 0 : i32
    return %arg2, %arg1 : i32, i32
  }
  func.func @transform_2(%arg0: i32, %arg1: i32, %arg2: i32) -> (i32, i32) {
    %c0_i32 = arith.constant 0 : i32
    %c0_i32_0 = arith.constant 0 : i32
    return %c0_i32, %arg1 : i32, i32
  }
  func.func @transform_3(%arg0: i32, %arg1: i32, %arg2: i32) -> (i32, i32) {
    %c0_i32 = arith.constant 0 : i32
    return %arg0, %arg1 : i32, i32
  }
}

</mosaic_0001>

<llo_original>
// kernel: xavier_linear_forward.1
$region0: #{xavier_linear_forward.1}
  #allocation0 [shape = 'u32[]', space=smem, size = 0x4, offset = 0x4, fixed_abs, tag = 'smem constant byte address 0x4 - core index']
  #allocation1 [shape = 'u32[144,128]{1,0:T(1,128)}', space=vmem, size = 0x12000, scoped, tag = 'internal scratch']
  %s0 = inlined_call_operand.vmem [shape: f32[112,384], index: 0, kind: input, shape index: {}]
  %s1 = inlined_call_operand.hbm [shape: f32[384,256], index: 1, kind: input, shape index: {}]
  %s2 = inlined_call_operand.vmem [shape: f32[1,256], index: 2, kind: input, shape index: {}]
  %s3 = inlined_call_operand.vmem [shape: f32[112,256], index: 3, kind: output, shape index: {}]
  %s4 = sld [smem:[#allocation0]]
  $region129: #{xavier_linear_forward.1} parent=0
    _
  %s6 = ssub.s32 1, %s4
  %s7 = scalar_select 0, %s6, %s4
  $region1: #{xavier_linear_forward.1} parent=0
    #allocation2 [shape = 'u8[57344]{0}', space=vmem, size = 0xe000, scoped, tag = 'input window, operand 0']
    #allocation3 [shape = 'u8[131072]{0}', space=vmem, size = 0x20000, scoped, tag = 'input window, operand 1']
    #allocation4 [shape = 's32[2]{0}', space=sflag, size = 0x8, scoped, tag = 'scoped memory for xavier_linear_forward.1']
    #allocation5 [shape = 'u8[57344]{0}', space=vmem, size = 0xe000, scoped, tag = 'output window, operand 0']
    %8 = vsyncpa [#allocation4], 0
    %s9 = scalar_lea.sflag [#allocation4], 1
    %10 = vsyncpa %s9, 0
    loop: start=0, step=1, limit=14
    $region2: #{xavier_linear_forward.1} parent=1 // loop_pre_header
      _
    $region3: #{xavier_linear_forward.1} parent=1 // loop_header
      %s12 = sphi 0, %s16
      %p13 = scmp.ge.s32.totalorder %s12, 14
      %s19 = sphi 0, %s38
      %s20 = sphi 0, %s34
      %s21 = sphi 0, %s30
      %s22 = sphi 0, %s19
      %s23 = sphi 0, %s20
      %s24 = sphi 0, %s21
      %s25 = sphi 0, %s22
      %s26 = sphi 0, %s23
      %s27 = sphi 0, %s24
      %s43 = sphi 0, %s45
      %s46 = sphi 0, %s43
      %s47 = sphi 0, %s46
      %s63 = sphi 0, %s47
      %s71 = sphi 0, %s73
      %s74 = sphi 0, %s71
      %s75 = sphi 0, %s74
      %s91 = sphi 0, %s75
      %s97 = sphi 0, %s99
      %s100 = sphi 0, %s97
      %s101 = sphi 0, %s100
      %s117 = sphi 0, %s101
      %s125 = sphi 0, %s127
      %s128 = sphi 0, %s125
      %s129 = sphi 0, %s128
      %s145 = sphi 0, %s129
    $region4: #{xavier_linear_forward.1} parent=1 // loop_header_branch
      %15 = sbr.rel (%p13) target = $region8
    $region5: #{xavier_linear_forward.1} parent=1 // loop_body
      %s17 = ssub.s32 %s12, 1
      %s18 = ssub.s32 %s12, 2
      %s28 = sadd.s32 1, %s21
      %p29 = scmp.ge.s32.totalorder %s28, 3
      %s30 = scalar_select %p29, 0, %s28
      %s31 = sadd.s32 1, %s20
      %s32 = scalar_select %p29, %s31, %s20
      %p33 = scmp.ge.s32.totalorder %s32, 2
      %s34 = scalar_select %p33, 0, %s32
      %s35 = sadd.s32 1, %s19
      %s36 = scalar_select %p33, %s35, %s19
      %p37 = scmp.ge.s32.totalorder %s36, 2
      %s38 = scalar_select %p37, 0, %s36
      %s39 = ssub.s32 %s19, %s38
      %s40 = ssub.s32 %s21, %s30
      %s41 = sor.u32 %s39, %s40
      %p42 = scmp.eq.s32.totalorder %s41, 0
      %s44 = sadd.s32 %s43, 1
      %s45 = scalar_select %p42, %s43, %s44
      %p48 = pneg %p42
      %p49 = scmp.eq.s32.totalorder %s12, 11
      %p50 = por %p48, %p49
      %p51 = scmp.ne.s32.totalorder %s43, %s46
      %p52 = scmp.eq.s32.totalorder %s12, 0
      %p53 = por %p51, %p52
      %p54 = scmp.ne.s32.totalorder %s43, %s46
      %p55 = scmp.eq.s32.totalorder %s17, 11
      %p56 = por %p54, %p55
      %p57 = scmp.ne.s32.totalorder %s46, %s47
      %p58 = scmp.eq.s32.totalorder %s17, 0
      %p59 = por %p57, %p58
      %p60 = scmp.ne.s32.totalorder %s46, %s47
      %p61 = scmp.eq.s32.totalorder %s18, 11
      %p62 = por %p60, %p61
      %p64 = scmp.ne.s32.totalorder %s47, %s63
      %p65 = scmp.eq.s32.totalorder %s18, 0
      %p66 = por %p64, %p65
      %s67 = ssub.s32 %s21, %s30
      %s68 = ssub.s32 %s20, %s34
      %s69 = sor.u32 %s67, %s68
      %p70 = scmp.eq.s32.totalorder %s69, 0
      %s72 = sadd.s32 %s71, 1
      %s73 = scalar_select %p70, %s71, %s72
      %p76 = pneg %p70
      %p77 = scmp.eq.s32.totalorder %s12, 11
      %p78 = por %p76, %p77
      %p79 = scmp.ne.s32.totalorder %s71, %s74
      %p80 = scmp.eq.s32.totalorder %s12, 0
      %p81 = por %p79, %p80
      %p82 = scmp.ne.s32.totalorder %s71, %s74
      %p83 = scmp.eq.s32.totalorder %s17, 11
      %p84 = por %p82, %p83
      %p85 = scmp.ne.s32.totalorder %s74, %s75
      %p86 = scmp.eq.s32.totalorder %s17, 0
      %p87 = por %p85, %p86
      %p88 = scmp.ne.s32.totalorder %s74, %s75
      %p89 = scmp.eq.s32.totalorder %s18, 11
      %p90 = por %p88, %p89
      %p92 = scmp.ne.s32.totalorder %s75, %s91
      %p93 = scmp.eq.s32.totalorder %s18, 0
      %p94 = por %p92, %p93
      %s95 = ssub.s32 %s20, %s34
      %p96 = scmp.eq.s32.totalorder %s95, 0
      %s98 = sadd.s32 %s97, 1
      %s99 = scalar_select %p96, %s97, %s98
      %p102 = pneg %p96
      %p103 = scmp.eq.s32.totalorder %s12, 11
      %p104 = por %p102, %p103
      %p105 = scmp.ne.s32.totalorder %s97, %s100
      %p106 = scmp.eq.s32.totalorder %s12, 0
      %p107 = por %p105, %p106
      %p108 = scmp.ne.s32.totalorder %s97, %s100
      %p109 = scmp.eq.s32.totalorder %s17, 11
      %p110 = por %p108, %p109
      %p111 = scmp.ne.s32.totalorder %s100, %s101
      %p112 = scmp.eq.s32.totalorder %s17, 0
      %p113 = por %p111, %p112
      %p114 = scmp.ne.s32.totalorder %s100, %s101
      %p115 = scmp.eq.s32.totalorder %s18, 11
      %p116 = por %p114, %p115
      %p118 = scmp.ne.s32.totalorder %s101, %s117
      %p119 = scmp.eq.s32.totalorder %s18, 0
      %p120 = por %p118, %p119
      %s121 = ssub.s32 %s19, %s38
      %s122 = ssub.s32 %s20, %s34
      %s123 = sor.u32 %s121, %s122
      %p124 = scmp.eq.s32.totalorder %s123, 0
      %s126 = sadd.s32 %s125, 1
      %s127 = scalar_select %p124, %s125, %s126
      %p130 = pneg %p124
      %p131 = scmp.eq.s32.totalorder %s12, 11
      %p132 = por %p130, %p131
      %p133 = scmp.ne.s32.totalorder %s125, %s128
      %p134 = scmp.eq.s32.totalorder %s12, 0
      %p135 = por %p133, %p134
      %p136 = scmp.ne.s32.totalorder %s125, %s128
      %p137 = scmp.eq.s32.totalorder %s17, 11
      %p138 = por %p136, %p137
      %p139 = scmp.ne.s32.totalorder %s128, %s129
      %p140 = scmp.eq.s32.totalorder %s17, 0
      %p141 = por %p139, %p140
      %p142 = scmp.ne.s32.totalorder %s128, %s129
      %p143 = scmp.eq.s32.totalorder %s18, 11
      %p144 = por %p142, %p143
      %p146 = scmp.ne.s32.totalorder %s129, %s145
      %p147 = scmp.eq.s32.totalorder %s18, 0
      %p148 = por %p146, %p147
      %p149 = scmp.le.s32.totalorder 1, %s12
      %p150 = scmp.lt.s32.totalorder %s12, 13
      %p151 = pnand %p149, %p150
      %p152 = pneg %p151
      // Predicated region
      $region9: #{xavier_linear_forward.1} parent=5 // pred_check
        _
      $region10: #{xavier_linear_forward.1} parent=5 // pred_check_branch
        %154 = sbr.rel (%p151) target = $region12
      $region11: #{xavier_linear_forward.1} parent=5 // pred_region
        %s155 = ssub.s32 %s12, 1
      $region12: #{xavier_linear_forward.1} parent=5 // pred_fallthru
        _
      %p156 = scmp.lt.s32.totalorder %s12, 12
      // Predicated region
      $region13: #{xavier_linear_forward.1} parent=5 // pred_check
        %p157 = pneg %p156
      $region14: #{xavier_linear_forward.1} parent=5 // pred_check_branch
        %159 = sbr.rel (%p157) target = $region16
      $region15: #{xavier_linear_forward.1} parent=5 // pred_region
        // Predicated region
        $region17: #{xavier_linear_forward.1} parent=15 // pred_check
          %p160 = pneg %p53
        $region18: #{xavier_linear_forward.1} parent=15 // pred_check_branch
          %162 = sbr.rel (%p160) target = $region20
        $region19: #{xavier_linear_forward.1} parent=15 // pred_region
          %s163 = sand.u32 %s43, 1
          %s164 = sand.u32 %s43, 1
          %s165 = smul.addr %s164, 56
          %s166 = scalar_lea.vmem [#allocation2], %s165
          %s167 = smul.u32 7, %s19
          %s168 = smul.addr %s167, 3
          %s169 = sadd.s32 %s21, %s168
          %s170 = smul.addr %s169, 8
          %s171 = scalar_lea.vmem %s0, %s170
          // Predicated region
          $region21: #{xavier_linear_forward.1} parent=19 // pred_check
            _
          $region22: #{xavier_linear_forward.1} parent=19 // pred_check_branch
            %173 = sbr.rel (0) target = $region24
          $region23: #{xavier_linear_forward.1} parent=19 // pred_region
            // Predicated region
            $region25: #{xavier_linear_forward.1} parent=23 // pred_check
              _
            $region26: #{xavier_linear_forward.1} parent=23 // pred_check_branch
              %175 = sbr.rel (0) target = $region28
            $region27: #{xavier_linear_forward.1} parent=23 // pred_region
              // Predicated region
              $region40: #{xavier_linear_forward.1} parent=27 // pred_check
                _
              $region41: #{xavier_linear_forward.1} parent=27 // pred_check_branch
                %202 = sbr.rel (0) target = $region43
              $region42: #{xavier_linear_forward.1} parent=27 // pred_region
                loop: start=0, step=1, limit=1
                $region44: #{xavier_linear_forward.1} parent=42 // loop_pre_header
                  _
                $region45: #{xavier_linear_forward.1} parent=42 // loop_header
                  %s204 = sphi 0, %s208
                  %p205 = scmp.ge.s32.totalorder %s204, 1
                  %s209 = sphi %s171, %s171
                  %s210 = sphi %s166, %s166
                $region46: #{xavier_linear_forward.1} parent=42 // loop_header_branch
                  %207 = sbr.rel (%p205) target = $region50
                $region47: #{xavier_linear_forward.1} parent=42 // loop_body
                  %v211 = vld [vmem:[%s209] sm:$0xff]
                  %212 = vst [vmem:[%s210] sm:$0xff] %v211
                  %v213 = vld [vmem:[%s209 + $0x18] sm:$0xff]
                  %214 = vst [vmem:[%s210 + $0x8] sm:$0xff] %v213
                  %v215 = vld [vmem:[%s209 + $0x30] sm:$0xff]
                  %216 = vst [vmem:[%s210 + $0x10] sm:$0xff] %v215
                  %v217 = vld [vmem:[%s209 + $0x48] sm:$0xff]
                  %218 = vst [vmem:[%s210 + $0x18] sm:$0xff] %v217
                  %v219 = vld [vmem:[%s209 + $0x60] sm:$0xff]
                  %220 = vst [vmem:[%s210 + $0x20] sm:$0xff] %v219
                  %v221 = vld [vmem:[%s209 + $0x78] sm:$0xff]
                  %222 = vst [vmem:[%s210 + $0x28] sm:$0xff] %v221
                  %v223 = vld [vmem:[%s209 + $0x90] sm:$0xff]
                  %224 = vst [vmem:[%s210 + $0x30] sm:$0xff] %v223
                $region48: #{xavier_linear_forward.1} parent=42 // loop_footer
                  %s208 = sadd.s32 1, %s204
                $region49: #{xavier_linear_forward.1} parent=42 // loop_footer_branch
                  %203 = sbr.rel target = $region45
                $region50: #{xavier_linear_forward.1} parent=42 // loop_exit
                  _
              $region43: #{xavier_linear_forward.1} parent=27 // pred_fallthru
                _
              // Predicated region
              $region51: #{xavier_linear_forward.1} parent=27 // pred_check
                _
              $region52: #{xavier_linear_forward.1} parent=27 // pred_check_branch
                %226 = sbr.rel target = $region54
              $region53: #{xavier_linear_forward.1} parent=27 // pred_region
                _
              $region54: #{xavier_linear_forward.1} parent=27 // pred_fallthru
                _
            $region28: #{xavier_linear_forward.1} parent=23 // pred_fallthru
              _
            // Predicated region
            $region29: #{xavier_linear_forward.1} parent=23 // pred_check
              _
            $region30: #{xavier_linear_forward.1} parent=23 // pred_check_branch
              %177 = sbr.rel target = $region32
            $region31: #{xavier_linear_forward.1} parent=23 // pred_region
              loop: start=0, step=1, limit=1
              $region33: #{xavier_linear_forward.1} parent=31 // loop_pre_header
                _
              $region34: #{xavier_linear_forward.1} parent=31 // loop_header
                %s180 = sphi 0, %s184
                %p181 = scmp.ge.s32.totalorder %s180, 1
                %s185 = sphi %s171, %s171
                %s186 = sphi %s166, %s166
              $region35: #{xavier_linear_forward.1} parent=31 // loop_header_branch
                %183 = sbr.rel (%p181) target = $region39
              $region36: #{xavier_linear_forward.1} parent=31 // loop_body
                %v187 = vld [vmem:[%s185] sm:$0xff]
                %188 = vst [vmem:[%s186] sm:$0xff] %v187
                %v189 = vld [vmem:[%s185 + $0x18] sm:$0xff]
                %190 = vst [vmem:[%s186 + $0x8] sm:$0xff] %v189
                %v191 = vld [vmem:[%s185 + $0x30] sm:$0xff]
                %192 = vst [vmem:[%s186 + $0x10] sm:$0xff] %v191
                %v193 = vld [vmem:[%s185 + $0x48] sm:$0xff]
                %194 = vst [vmem:[%s186 + $0x18] sm:$0xff] %v193
                %v195 = vld [vmem:[%s185 + $0x60] sm:$0xff]
                %196 = vst [vmem:[%s186 + $0x20] sm:$0xff] %v195
                %v197 = vld [vmem:[%s185 + $0x78] sm:$0xff]
                %198 = vst [vmem:[%s186 + $0x28] sm:$0xff] %v197
                %v199 = vld [vmem:[%s185 + $0x90] sm:$0xff]
                %200 = vst [vmem:[%s186 + $0x30] sm:$0xff] %v199
              $region37: #{xavier_linear_forward.1} parent=31 // loop_footer
                %s184 = sadd.s32 1, %s180
              $region38: #{xavier_linear_forward.1} parent=31 // loop_footer_branch
                %179 = sbr.rel target = $region34
              $region39: #{xavier_linear_forward.1} parent=31 // loop_exit
                _
            $region32: #{xavier_linear_forward.1} parent=23 // pred_fallthru
              _
          $region24: #{xavier_linear_forward.1} parent=19 // pred_fallthru
            _
          %227 = vnop
        $region20: #{xavier_linear_forward.1} parent=15 // pred_fallthru
          _
        // Predicated region
        $region55: #{xavier_linear_forward.1} parent=15 // pred_check
          %p228 = pneg %p81
        $region56: #{xavier_linear_forward.1} parent=15 // pred_check_branch
          %230 = sbr.rel (%p228) target = $region58
        $region57: #{xavier_linear_forward.1} parent=15 // pred_region
          %s231 = sand.u32 %s71, 1
          %s232 = scalar_lea.sflag [#allocation4], %s231
          %s233 = sand.u32 %s71, 1
          %s234 = smul.addr %s233, 128
          %s235 = scalar_lea.vmem [#allocation3], %s234
          %s236 = smul.u32 16, %s21
          %s238 = ssub.s32 2048, 2048
          %239 = vsyncadd %s232, %s238
          %s240 = smul.addr %s236, 2
          %s241 = sadd.s32 %s20, %s240
          %s242 = smul.addr %s241, 128
          %s243 = scalar_lea.hbm %s1, %s242
          %s244 = sshll.u32 %s235, 4
          %s245 = int_to_ptr.vmem [resolvable:$true] %s244
          %250 = dma.hbm_to_vmem [thread:$0]  %s243, 2048, %s245, %s232, 256, 128, 8
        $region58: #{xavier_linear_forward.1} parent=15 // pred_fallthru
          _
        // Predicated region
        $region59: #{xavier_linear_forward.1} parent=15 // pred_check
          %p251 = pneg %p107
        $region60: #{xavier_linear_forward.1} parent=15 // pred_check_branch
          %253 = sbr.rel (%p251) target = $region62
        $region61: #{xavier_linear_forward.1} parent=15 // pred_region
          %p254 = scmp.lt.s32.totalorder %s20, 1
          %s255 = scalar_select %p254, %s20, 1
          %s256 = scalar_lea.vmem %s2, %s255
        $region62: #{xavier_linear_forward.1} parent=15 // pred_fallthru
          _
      $region16: #{xavier_linear_forward.1} parent=5 // pred_fallthru
        _
      %p257 = scmp.le.s32.totalorder 1, %s12
      %p258 = scmp.lt.s32.totalorder %s12, 13
      %p259 = pnand %p257, %p258
      %p260 = pneg %p259
      // Predicated region
      $region63: #{xavier_linear_forward.1} parent=5 // pred_check
        _
      $region64: #{xavier_linear_forward.1} parent=5 // pred_check_branch
        %262 = sbr.rel (%p259) target = $region66
      $region65: #{xavier_linear_forward.1} parent=5 // pred_region
        %s263 = ssub.s32 %s12, 1
        %s264 = sand.u32 %s46, 1
        %s265 = sand.u32 %s46, 1
        %s266 = smul.addr %s265, 56
        %s267 = scalar_lea.vmem [#allocation2], %s266
        // Predicated region
        $region67: #{xavier_linear_forward.1} parent=65 // pred_check
          %p268 = pneg %p59
        $region68: #{xavier_linear_forward.1} parent=65 // pred_check_branch
          %270 = sbr.rel (%p268) target = $region70
        $region69: #{xavier_linear_forward.1} parent=65 // pred_region
          _
        $region70: #{xavier_linear_forward.1} parent=65 // pred_fallthru
          _
        %s271 = sand.u32 %s74, 1
        %s272 = scalar_lea.sflag [#allocation4], %s271
        %s273 = sand.u32 %s74, 1
        %s274 = smul.addr %s273, 128
        %s275 = scalar_lea.vmem [#allocation3], %s274
        // Predicated region
        $region71: #{xavier_linear_forward.1} parent=65 // pred_check
          %p276 = pneg %p87
        $region72: #{xavier_linear_forward.1} parent=65 // pred_check_branch
          %278 = sbr.rel (%p276) target = $region74
        $region73: #{xavier_linear_forward.1} parent=65 // pred_region
          %279 = dma.done %s272, 2048
        $region74: #{xavier_linear_forward.1} parent=65 // pred_fallthru
          _
        %s280 = sand.u32 %s46, 1
        %s281 = sand.u32 %s46, 1
        %s282 = smul.addr %s281, 56
        %s283 = scalar_lea.vmem [#allocation2], %s282
        %p284 = pneg %p59
        %p285 = pneg %p56
        %s286 = sand.u32 %s74, 1
        %s287 = scalar_lea.sflag [#allocation4], %s286
        %s288 = sand.u32 %s74, 1
        %s289 = smul.addr %s288, 128
        %s290 = scalar_lea.vmem [#allocation3], %s289
        %p291 = pneg %p87
        %p292 = pneg %p84
        %p293 = scmp.lt.s32.totalorder %s23, 1
        %s294 = scalar_select %p293, %s23, 1
        %s295 = scalar_lea.vmem %s2, %s294
        %p296 = pneg %p113
        %p297 = pneg %p110
        %p298 = pneg %p141
        %p299 = pneg %p138
        %s300 = sand.u32 %s128, 1
        %s301 = sand.u32 %s128, 1
        %s302 = smul.addr %s301, 56
        %s303 = scalar_lea.vmem [#allocation5], %s302
        %s304 = smul.u32 7, %s22
        %s305 = smul.u32 16, %s24
        %p306 = scmp.lt.s32.totalorder %s23, 1
        %s307 = scalar_select %p306, %s23, 1
        %s308 = scalar_lea.vmem %s2, %s307
        %s309 = smul.u32 7, %s22
        %v310 = vld [vmem:[%s267] sm:$0xff]
        %v311 = vld [vmem:[%s267 + $0x8] sm:$0xff]
        %v312 = vld [vmem:[%s267 + $0x10] sm:$0xff]
        %v313 = vld [vmem:[%s267 + $0x18] sm:$0xff]
        %v314 = vld [vmem:[%s267 + $0x20] sm:$0xff]
        %v315 = vld [vmem:[%s267 + $0x28] sm:$0xff]
        %v316 = vld [vmem:[%s267 + $0x30] sm:$0xff]
        %v317 = vld [vmem:[%s275] sm:$0xff]
        %v318 = vld [vmem:[%s275 + $0x8] sm:$0xff]
        %v319 = vld [vmem:[%s275 + $0x10] sm:$0xff]
        %v320 = vld [vmem:[%s275 + $0x18] sm:$0xff]
        %v321 = vld [vmem:[%s275 + $0x20] sm:$0xff]
        %v322 = vld [vmem:[%s275 + $0x28] sm:$0xff]
        %v323 = vld [vmem:[%s275 + $0x30] sm:$0xff]
        %v324 = vld [vmem:[%s275 + $0x38] sm:$0xff]
        %v325 = vld [vmem:[%s275 + $0x40] sm:$0xff]
        %v326 = vld [vmem:[%s275 + $0x48] sm:$0xff]
        %v327 = vld [vmem:[%s275 + $0x50] sm:$0xff]
        %v328 = vld [vmem:[%s275 + $0x58] sm:$0xff]
        %v329 = vld [vmem:[%s275 + $0x60] sm:$0xff]
        %v330 = vld [vmem:[%s275 + $0x68] sm:$0xff]
        %v331 = vld [vmem:[%s275 + $0x70] sm:$0xff]
        %v332 = vld [vmem:[%s275 + $0x78] sm:$0xff]
        %333 = vmatprep.subr.mxu0 0.0
        %334 = vmatpush1.msra.mxu0 %v317
        %335 = vmatprep.subr.mxu0 0.0
        %336 = vmatpush1.msra.mxu0 %v318
        %337 = vmatprep.subr.mxu0 0.0
        %338 = vmatpush1.msra.mxu0 %v319
        %339 = vmatprep.subr.mxu0 0.0
        %340 = vmatpush1.msra.mxu0 %v320
        %341 = vmatprep.subr.mxu0 0.0
        %342 = vmatpush1.msra.mxu0 %v321
        %343 = vmatprep.subr.mxu0 0.0
        %344 = vmatpush1.msra.mxu0 %v322
        %345 = vmatprep.subr.mxu0 0.0
        %346 = vmatpush1.msra.mxu0 %v323
        %347 = vmatprep.subr.mxu0 0.0
        %348 = vmatpush1.msra.mxu0 %v324
        %349 = vmatprep.subr.mxu0 0.0
        %350 = vmatpush1.msra.mxu0 %v325
        %351 = vmatprep.subr.mxu0 0.0
        %352 = vmatpush1.msra.mxu0 %v326
        %353 = vmatprep.subr.mxu0 0.0
        %354 = vmatpush1.msra.mxu0 %v327
        %355 = vmatprep.subr.mxu0 0.0
        %356 = vmatpush1.msra.mxu0 %v328
        %357 = vmatprep.subr.mxu0 0.0
        %358 = vmatpush1.msra.mxu0 %v329
        %359 = vmatprep.subr.mxu0 0.0
        %360 = vmatpush1.msra.mxu0 %v330
        %361 = vmatprep.subr.mxu0 0.0
        %362 = vmatpush1.msra.mxu0 %v331
        %363 = vmatprep.subr.mxu0 0.0
        %364 = vmatpush1.msra.mxu0 %v332
        %365 = vmatprep.subr.mxu0 0.0
        %366 = vmatpush1.msra.mxu0 0.0
        %367 = vmatprep.subr.mxu0 0.0
        %368 = vmatpush1.msra.mxu0 0.0
        %369 = vmatprep.subr.mxu0 0.0
        %370 = vmatpush1.msra.mxu0 0.0
        %371 = vmatprep.subr.mxu0 0.0
        %372 = vmatpush1.msra.mxu0 0.0
        %373 = vmatprep.subr.mxu0 0.0
        %374 = vmatpush1.msra.mxu0 0.0
        %375 = vmatprep.subr.mxu0 0.0
        %376 = vmatpush1.msra.mxu0 0.0
        %377 = vmatprep.subr.mxu0 0.0
        %378 = vmatpush1.msra.mxu0 0.0
        %379 = vmatprep.subr.mxu0 0.0
        %380 = vmatpush1.msra.mxu0 0.0
        %381 = vmatprep.subr.mxu0 0.0
        %382 = vmatpush1.msra.mxu0 0.0
        %383 = vmatprep.subr.mxu0 0.0
        %384 = vmatpush1.msra.mxu0 0.0
        %385 = vmatprep.subr.mxu0 0.0
        %386 = vmatpush1.msra.mxu0 0.0
        %387 = vmatprep.subr.mxu0 0.0
        %388 = vmatpush1.msra.mxu0 0.0
        %389 = vmatprep.subr.mxu0 0.0
        %390 = vmatpush1.msra.mxu0 0.0
        %391 = vmatprep.subr.mxu0 0.0
        %392 = vmatpush1.msra.mxu0 0.0
        %393 = vmatprep.subr.mxu0 0.0
        %394 = vmatpush1.msra.mxu0 0.0
        %395 = vmatprep.subr.mxu0 0.0
        %396 = vmatpush1.msra.mxu0 0.0
        %397 = vmatprep.mubr.f32.mxu0 0.0
        %398 = vmatmul.mubr.f32.gmra.mrb[0].mxu0 %v310
        %v399 = vpop.f32.mrb[0].mxu0
        %v400 = vadd.f32 0.0, %v399
        %v401 = vpop.f32.mrb[0].mxu0
        %402 = vmatprep.mubr.f32.mxu0 0.0
        %403 = vmatmul.mubr.f32.gmra.mrb[0].mxu0 %v311
        %v404 = vpop.f32.mrb[0].mxu0
        %v405 = vadd.f32 0.0, %v404
        %v406 = vpop.f32.mrb[0].mxu0
        %407 = vmatprep.mubr.f32.mxu0 0.0
        %408 = vmatmul.mubr.f32.gmra.mrb[0].mxu0 %v312
        %v409 = vpop.f32.mrb[0].mxu0
        %v410 = vadd.f32 0.0, %v409
        %v411 = vpop.f32.mrb[0].mxu0
        %412 = vmatprep.mubr.f32.mxu0 0.0
        %413 = vmatmul.mubr.f32.gmra.mrb[0].mxu0 %v313
        %v414 = vpop.f32.mrb[0].mxu0
        %v415 = vadd.f32 0.0, %v414
        %v416 = vpop.f32.mrb[0].mxu0
        %417 = vmatprep.mubr.f32.mxu0 0.0
        %418 = vmatmul.mubr.f32.gmra.mrb[0].mxu0 %v314
        %v419 = vpop.f32.mrb[0].mxu0
        %v420 = vadd.f32 0.0, %v419
        %v421 = vpop.f32.mrb[0].mxu0
        %422 = vmatprep.mubr.f32.mxu0 0.0
        %423 = vmatmul.mubr.f32.gmra.mrb[0].mxu0 %v315
        %v424 = vpop.f32.mrb[0].mxu0
        %v425 = vadd.f32 0.0, %v424
        %v426 = vpop.f32.mrb[0].mxu0
        %427 = vmatprep.mubr.f32.mxu0 0.0
        %428 = vmatmul.mubr.f32.gmra.mrb[0].mxu0 %v316
        %v429 = vpop.f32.mrb[0].mxu0
        %v430 = vadd.f32 0.0, %v429
        %v431 = vpop.f32.mrb[0].mxu0
        %432 = vdwg.mxu0
        %p433 = scmp.eq.s32.totalorder %s24, 0
        // Predicated region
        $region75: #{xavier_linear_forward.1} parent=65 // pred_check
          %p434 = pneg %p433
        $region76: #{xavier_linear_forward.1} parent=65 // pred_check_branch
          %436 = sbr.rel (%p434) target = $region78
        $region77: #{xavier_linear_forward.1} parent=65 // pred_region
          %v437 = vld [vmem:[%s308] sm:$0x1]
          %v439 = vlaneseq
          %v440 = vshrl.u32 %v439, 7
          %v441 = vsub.s32 0, %v440
          %v442 = vrot.slane %v437, %v441
          %v444 = vadd.f32 %v400, %v442
          %v445 = vadd.f32 %v405, %v442
          %v446 = vadd.f32 %v410, %v442
          %v447 = vadd.f32 %v415, %v442
          %v448 = vadd.f32 %v420, %v442
          %v449 = vadd.f32 %v425, %v442
          %v450 = vadd.f32 %v430, %v442
          %451 = vst [vmem:[%s303] sm:$0xff] %v444
          %452 = vst [vmem:[%s303 + $0x8] sm:$0xff] %v445
          %453 = vst [vmem:[%s303 + $0x10] sm:$0xff] %v446
          %454 = vst [vmem:[%s303 + $0x18] sm:$0xff] %v447
          %455 = vst [vmem:[%s303 + $0x20] sm:$0xff] %v448
          %456 = vst [vmem:[%s303 + $0x28] sm:$0xff] %v449
          %457 = vst [vmem:[%s303 + $0x30] sm:$0xff] %v450
        $region78: #{xavier_linear_forward.1} parent=65 // pred_fallthru
          _
        %p458 = scmp.gt.s32.totalorder %s24, 0
        // Predicated region
        $region79: #{xavier_linear_forward.1} parent=65 // pred_check
          %p459 = pneg %p458
        $region80: #{xavier_linear_forward.1} parent=65 // pred_check_branch
          %461 = sbr.rel (%p459) target = $region82
        $region81: #{xavier_linear_forward.1} parent=65 // pred_region
          %v462 = vld [vmem:[%s303] sm:$0xff]
          %v463 = vld [vmem:[%s303 + $0x8] sm:$0xff]
          %v464 = vld [vmem:[%s303 + $0x10] sm:$0xff]
          %v465 = vld [vmem:[%s303 + $0x18] sm:$0xff]
          %v466 = vld [vmem:[%s303 + $0x20] sm:$0xff]
          %v467 = vld [vmem:[%s303 + $0x28] sm:$0xff]
          %v468 = vld [vmem:[%s303 + $0x30] sm:$0xff]
          %v469 = vadd.f32 %v462, %v400
          %v470 = vadd.f32 %v463, %v405
          %v471 = vadd.f32 %v464, %v410
          %v472 = vadd.f32 %v465, %v415
          %v473 = vadd.f32 %v466, %v420
          %v474 = vadd.f32 %v467, %v425
          %v475 = vadd.f32 %v468, %v430
          %476 = vst [vmem:[%s303] sm:$0xff] %v469
          %477 = vst [vmem:[%s303 + $0x8] sm:$0xff] %v470
          %478 = vst [vmem:[%s303 + $0x10] sm:$0xff] %v471
          %479 = vst [vmem:[%s303 + $0x18] sm:$0xff] %v472
          %480 = vst [vmem:[%s303 + $0x20] sm:$0xff] %v473
          %481 = vst [vmem:[%s303 + $0x28] sm:$0xff] %v474
          %482 = vst [vmem:[%s303 + $0x30] sm:$0xff] %v475
        $region82: #{xavier_linear_forward.1} parent=65 // pred_fallthru
          _
        %s483 = sand.u32 %s128, 1
        %s484 = sand.u32 %s128, 1
        %s485 = smul.addr %s484, 56
        %s486 = scalar_lea.vmem [#allocation5], %s485
        // Predicated region
        $region83: #{xavier_linear_forward.1} parent=65 // pred_check
          %p487 = pneg %p138
        $region84: #{xavier_linear_forward.1} parent=65 // pred_check_branch
          %489 = sbr.rel (%p487) target = $region86
        $region85: #{xavier_linear_forward.1} parent=65 // pred_region
          %s490 = smul.u32 7, %s22
          %s491 = smul.addr %s490, 2
          %s492 = sadd.s32 %s23, %s491
          %s493 = smul.addr %s492, 8
          %s494 = scalar_lea.vmem %s3, %s493
          // Predicated region
          $region87: #{xavier_linear_forward.1} parent=85 // pred_check
            _
          $region88: #{xavier_linear_forward.1} parent=85 // pred_check_branch
            %496 = sbr.rel (0) target = $region90
          $region89: #{xavier_linear_forward.1} parent=85 // pred_region
            // Predicated region
            $region91: #{xavier_linear_forward.1} parent=89 // pred_check
              _
            $region92: #{xavier_linear_forward.1} parent=89 // pred_check_branch
              %498 = sbr.rel (0) target = $region94
            $region93: #{xavier_linear_forward.1} parent=89 // pred_region
              // Predicated region
              $region106: #{xavier_linear_forward.1} parent=93 // pred_check
                _
              $region107: #{xavier_linear_forward.1} parent=93 // pred_check_branch
                %525 = sbr.rel (0) target = $region109
              $region108: #{xavier_linear_forward.1} parent=93 // pred_region
                loop: start=0, step=1, limit=1
                $region110: #{xavier_linear_forward.1} parent=108 // loop_pre_header
                  _
                $region111: #{xavier_linear_forward.1} parent=108 // loop_header
                  %s527 = sphi 0, %s531
                  %p528 = scmp.ge.s32.totalorder %s527, 1
                  %s532 = sphi %s486, %s486
                  %s533 = sphi %s494, %s494
                $region112: #{xavier_linear_forward.1} parent=108 // loop_header_branch
                  %530 = sbr.rel (%p528) target = $region116
                $region113: #{xavier_linear_forward.1} parent=108 // loop_body
                  %v534 = vld [vmem:[%s532] sm:$0xff]
                  %535 = vst [vmem:[%s533] sm:$0xff] %v534
                  %v536 = vld [vmem:[%s532 + $0x8] sm:$0xff]
                  %537 = vst [vmem:[%s533 + $0x10] sm:$0xff] %v536
                  %v538 = vld [vmem:[%s532 + $0x10] sm:$0xff]
                  %539 = vst [vmem:[%s533 + $0x20] sm:$0xff] %v538
                  %v540 = vld [vmem:[%s532 + $0x18] sm:$0xff]
                  %541 = vst [vmem:[%s533 + $0x30] sm:$0xff] %v540
                  %v542 = vld [vmem:[%s532 + $0x20] sm:$0xff]
                  %543 = vst [vmem:[%s533 + $0x40] sm:$0xff] %v542
                  %v544 = vld [vmem:[%s532 + $0x28] sm:$0xff]
                  %545 = vst [vmem:[%s533 + $0x50] sm:$0xff] %v544
                  %v546 = vld [vmem:[%s532 + $0x30] sm:$0xff]
                  %547 = vst [vmem:[%s533 + $0x60] sm:$0xff] %v546
                $region114: #{xavier_linear_forward.1} parent=108 // loop_footer
                  %s531 = sadd.s32 1, %s527
                $region115: #{xavier_linear_forward.1} parent=108 // loop_footer_branch
                  %526 = sbr.rel target = $region111
                $region116: #{xavier_linear_forward.1} parent=108 // loop_exit
                  _
              $region109: #{xavier_linear_forward.1} parent=93 // pred_fallthru
                _
              // Predicated region
              $region117: #{xavier_linear_forward.1} parent=93 // pred_check
                _
              $region118: #{xavier_linear_forward.1} parent=93 // pred_check_branch
                %549 = sbr.rel target = $region120
              $region119: #{xavier_linear_forward.1} parent=93 // pred_region
                _
              $region120: #{xavier_linear_forward.1} parent=93 // pred_fallthru
                _
            $region94: #{xavier_linear_forward.1} parent=89 // pred_fallthru
              _
            // Predicated region
            $region95: #{xavier_linear_forward.1} parent=89 // pred_check
              _
            $region96: #{xavier_linear_forward.1} parent=89 // pred_check_branch
              %500 = sbr.rel target = $region98
            $region97: #{xavier_linear_forward.1} parent=89 // pred_region
              loop: start=0, step=1, limit=1
              $region99: #{xavier_linear_forward.1} parent=97 // loop_pre_header
                _
              $region100: #{xavier_linear_forward.1} parent=97 // loop_header
                %s503 = sphi 0, %s507
                %p504 = scmp.ge.s32.totalorder %s503, 1
                %s508 = sphi %s486, %s486
                %s509 = sphi %s494, %s494
              $region101: #{xavier_linear_forward.1} parent=97 // loop_header_branch
                %506 = sbr.rel (%p504) target = $region105
              $region102: #{xavier_linear_forward.1} parent=97 // loop_body
                %v510 = vld [vmem:[%s508] sm:$0xff]
                %511 = vst [vmem:[%s509] sm:$0xff] %v510
                %v512 = vld [vmem:[%s508 + $0x8] sm:$0xff]
                %513 = vst [vmem:[%s509 + $0x10] sm:$0xff] %v512
                %v514 = vld [vmem:[%s508 + $0x10] sm:$0xff]
                %515 = vst [vmem:[%s509 + $0x20] sm:$0xff] %v514
                %v516 = vld [vmem:[%s508 + $0x18] sm:$0xff]
                %517 = vst [vmem:[%s509 + $0x30] sm:$0xff] %v516
                %v518 = vld [vmem:[%s508 + $0x20] sm:$0xff]
                %519 = vst [vmem:[%s509 + $0x40] sm:$0xff] %v518
                %v520 = vld [vmem:[%s508 + $0x28] sm:$0xff]
                %521 = vst [vmem:[%s509 + $0x50] sm:$0xff] %v520
                %v522 = vld [vmem:[%s508 + $0x30] sm:$0xff]
                %523 = vst [vmem:[%s509 + $0x60] sm:$0xff] %v522
              $region103: #{xavier_linear_forward.1} parent=97 // loop_footer
                %s507 = sadd.s32 1, %s503
              $region104: #{xavier_linear_forward.1} parent=97 // loop_footer_branch
                %502 = sbr.rel target = $region100
              $region105: #{xavier_linear_forward.1} parent=97 // loop_exit
                _
            $region98: #{xavier_linear_forward.1} parent=89 // pred_fallthru
              _
          $region90: #{xavier_linear_forward.1} parent=85 // pred_fallthru
            _
          %550 = vnop
        $region86: #{xavier_linear_forward.1} parent=65 // pred_fallthru
          _
      $region66: #{xavier_linear_forward.1} parent=5 // pred_fallthru
        _
      %p551 = scmp.le.s32.totalorder 2, %s12
      // Predicated region
      $region121: #{xavier_linear_forward.1} parent=5 // pred_check
        %p552 = pneg %p551
      $region122: #{xavier_linear_forward.1} parent=5 // pred_check_branch
        %554 = sbr.rel (%p552) target = $region124
      $region123: #{xavier_linear_forward.1} parent=5 // pred_region
        %s555 = ssub.s32 %s12, 2
        // Predicated region
        $region125: #{xavier_linear_forward.1} parent=123 // pred_check
          %p556 = pneg %p144
        $region126: #{xavier_linear_forward.1} parent=123 // pred_check_branch
          %558 = sbr.rel (%p556) target = $region128
        $region127: #{xavier_linear_forward.1} parent=123 // pred_region
          %s559 = sand.u32 %s129, 1
          %s560 = sand.u32 %s129, 1
          %s561 = smul.addr %s560, 56
          %s562 = scalar_lea.vmem [#allocation5], %s561
        $region128: #{xavier_linear_forward.1} parent=123 // pred_fallthru
          _
      $region124: #{xavier_linear_forward.1} parent=5 // pred_fallthru
        _
    $region6: #{xavier_linear_forward.1} parent=1 // loop_footer
      %s16 = sadd.s32 1, %s12
    $region7: #{xavier_linear_forward.1} parent=1 // loop_footer_branch
      %11 = sbr.rel target = $region3
    $region8: #{xavier_linear_forward.1} parent=1 // loop_exit
      _
    %563 = vsyncpa [#allocation4], 1
    %s564 = scalar_lea.sflag [#allocation4], 1
    %565 = vsyncpa %s564, 1

</llo_original>
